<compile_context>
chip_gen: v7x
topology: tpu7x:2x2x1
jax: 0.10.0
libtpu: 0.0.40
codegen_flags: <defaults>
</compile_context>

<pallas_src>
import jax
import jax.numpy as jnp
import numpy as np
from jax.experimental import pallas as pl
from jax.experimental.pallas import tpu as pltpu


# -----------------------------------------------------------------------------
# Grid constants (mirror torch.tensor([-1e4, *torch.linspace(-2, 10, 240001), 1e4]))
# -----------------------------------------------------------------------------
N_INTERIOR = 240001
N_PTS = N_INTERIOR + 2            # 240003
GRID_LO = -2.0
GRID_HI = 10.0
DX = (GRID_HI - GRID_LO) / (N_INTERIOR - 1)   # 5e-5 regular interior spacing
INV_DX = 1.0 / DX
SENTINEL = 10000.0

LANE = 128
SUBLANE = 8
MAX_BLOCK_ROWS = 1024             # (1024,128) f32 tile = 512 KiB/buffer


# -----------------------------------------------------------------------------
# Table construction (module __init__ equivalent)
# -----------------------------------------------------------------------------
def ricciardi_surrogate(mu, tau=0.02, tau_rp=0.002):
    # TODO(synk): the exact Ricciardi firing-rate integral needs erfi/Dawson
    # (not available in jax.scipy.special); a deterministic monotone surrogate
    # f-I curve is used to fill the value table instead.
    return 1.0 / (tau_rp + tau * jnp.logaddexp(0.0, -mu))


def build_tables():
    interior = jnp.linspace(GRID_LO, GRID_HI, N_INTERIOR, dtype=jnp.float32)
    points = jnp.concatenate(
        [jnp.array([-SENTINEL], jnp.float32), interior, jnp.array([SENTINEL], jnp.float32)]
    )
    values = ricciardi_surrogate(points).astype(jnp.float32)
    return points, values


# -----------------------------------------------------------------------------
# Pallas kernel: per-element linear interpolation blend.
# Inputs streamed per element: x, right-knot index (f32), values[idx_left],
# values[idx_right].  Knot positions are reconstructed arithmetically.
# -----------------------------------------------------------------------------
def interp_kernel(x_ref, idx_ref, vl_ref, vr_ref, o_ref):
    x = x_ref[...]
    kr = idx_ref[...]                      # float32 right-knot index
    v_l = vl_ref[...]
    v_r = vr_ref[...]

    kl = jnp.maximum(kr - 1.0, 0.0)

    def grid_point(k):
        interior = GRID_LO + (k - 1.0) * DX
        return jnp.where(k == 0.0, -SENTINEL,
                         jnp.where(k == float(N_PTS - 1), SENTINEL, interior))

    p_l = grid_point(kl)
    p_r = grid_point(kr)

    dist_l = jnp.maximum(x - p_l, 0.0)
    dist_r = jnp.maximum(p_r - x, 0.0)
    both_zero = jnp.logical_and(dist_l == 0.0, dist_r == 0.0)
    dist_l = jnp.where(both_zero, 1.0, dist_l)
    dist_r = jnp.where(both_zero, 1.0, dist_r)

    # numerator = values[idx_left] * dist_right + values[idx_right] * dist_left
    o_ref[...] = (v_l * dist_r + v_r * dist_l) / (dist_l + dist_r)


# -----------------------------------------------------------------------------
# Wrapper glue: closed-form bucketize + value gathers, then Pallas hot path
# -----------------------------------------------------------------------------
def _round_up(a, b):
    return ((a + b - 1) // b) * b


def _bucketize_regular(x2):
    """Closed-form torch.bucketize(x, points) for the regular grid + sentinels."""
    t = jnp.ceil((x2 - GRID_LO) * INV_DX)
    t = jnp.clip(t, 1.0, float(N_INTERIOR - 1))
    idx_right = jnp.where(x2 <= -SENTINEL, 0.0,
                jnp.where(x2 <= GRID_LO, 1.0,
                jnp.where(x2 > GRID_HI, float(N_PTS - 1), t + 1.0)))
    return idx_right                       # float32, in [0, N_PTS-1]


def ricciardi_pallas(x, values):
    orig_shape = x.shape
    xf = x.reshape(-1).astype(jnp.float32)
    n = xf.shape[0]

    rows_min = _round_up(pl.cdiv(n, LANE), SUBLANE)
    block_r = min(MAX_BLOCK_ROWS, rows_min)
    rows = _round_up(rows_min, block_r)
    n_pad = rows * LANE

    # Single pad/reshape of x; everything downstream is produced directly in the
    # lane-dense (rows, 128) layout the kernel consumes.
    x2 = jnp.pad(xf, (0, n_pad - n)).reshape(rows, LANE)

    idx_right_f = _bucketize_regular(x2)
    idx_right = idx_right_f.astype(jnp.int32)
    idx_left = jnp.maximum(idx_right - 1, 0)
    v_l = jnp.take(values, idx_left)
    v_r = jnp.take(values, idx_right)

    spec = pl.BlockSpec((block_r, LANE), lambda i: (i, 0))
    out2d = pl.pallas_call(
        interp_kernel,
        out_shape=jax.ShapeDtypeStruct((rows, LANE), jnp.float32),
        grid=(rows // block_r,),
        in_specs=[spec, spec, spec, spec],
        out_specs=spec,
        compiler_params=pltpu.CompilerParams(dimension_semantics=("parallel",)),
    )(x2, idx_right_f, v_l, v_r)

    return out2d.reshape(-1)[:n].reshape(orig_shape)


# -----------------------------------------------------------------------------
# Pure-JAX reference (faithful to the PyTorch RegularGridInterpolator math:
# searchsorted over the tabulated points + gathers)
# -----------------------------------------------------------------------------
def ricciardi_ref(x, points, values):
    n_pts = points.shape[0]
    xf = x.reshape(-1).astype(jnp.float32)
    idx_right = jnp.searchsorted(points, xf, side="left")
    idx_right = jnp.where(idx_right >= n_pts, n_pts - 1, idx_right)
    idx_left = jnp.clip(idx_right - 1, 0, n_pts - 1)
    dist_l = jnp.maximum(xf - jnp.take(points, idx_left), 0.0)
    dist_r = jnp.maximum(jnp.take(points, idx_right) - xf, 0.0)
    both_zero = (dist_l == 0.0) & (dist_r == 0.0)
    dist_l = jnp.where(both_zero, 1.0, dist_l)
    dist_r = jnp.where(both_zero, 1.0, dist_r)
    num = jnp.take(values, idx_left) * dist_r + jnp.take(values, idx_right) * dist_l
    return (num / (dist_l + dist_r)).reshape(x.shape)


if __name__ == "__main__":
    points, values = build_tables()

    key = jax.random.PRNGKey(0)
    x = jax.random.normal(key, (2, 4, 16, 16), dtype=jnp.float32)

    out = jax.block_until_ready(ricciardi_pallas(x, values))
    ref = jax.block_until_ready(ricciardi_ref(x, points, values))

    assert out.shape == x.shape and out.dtype == jnp.float32
    # Small tolerance headroom: the kernel reconstructs interior knot positions
    # arithmetically (lo + k*dx) instead of reading the f32 linspace table; the
    # two differ by <~1e-6 absolute, i.e. only a few 1e-6 relative in the output.
    np.testing.assert_allclose(np.asarray(out), np.asarray(ref), rtol=2e-5, atol=2e-5)

    print("KERNEL_OK")
</pallas_src>

<mosaic_0001>
module attributes {stable_mosaic.version = 11 : i64} {
  func.func @interp_kernel(%arg0: i32, %arg1: memref<16x128xf32, #tpu.memory_space<vmem>>, %arg2: memref<16x128xf32, #tpu.memory_space<vmem>>, %arg3: memref<16x128xf32, #tpu.memory_space<vmem>>, %arg4: memref<16x128xf32, #tpu.memory_space<vmem>>, %arg5: memref<16x128xf32, #tpu.memory_space<vmem>>) attributes {dimension_semantics = [#tpu.dimension_semantics<parallel>], iteration_bounds = array<i64: 1>, scalar_prefetch = 0 : i64, scratch_operands = 0 : i64, tpu.core_type = #tpu.core_type<tc>, window_params = [{transform_indices = @transform_0, window_bounds = array<i64: 16, 128>}, {transform_indices = @transform_1, window_bounds = array<i64: 16, 128>}, {transform_indices = @transform_2, window_bounds = array<i64: 16, 128>}, {transform_indices = @transform_3, window_bounds = array<i64: 16, 128>}, {transform_indices = @transform_4, window_bounds = array<i64: 16, 128>}]} {
    %c0 = arith.constant 0 : index
    %c0_0 = arith.constant 0 : index
    %0 = vector.load %arg1[%c0, %c0_0] : memref<16x128xf32, #tpu.memory_space<vmem>>, vector<16x128xf32>
    %c0_1 = arith.constant 0 : index
    %c0_2 = arith.constant 0 : index
    %1 = vector.load %arg2[%c0_1, %c0_2] : memref<16x128xf32, #tpu.memory_space<vmem>>, vector<16x128xf32>
    %c0_3 = arith.constant 0 : index
    %c0_4 = arith.constant 0 : index
    %2 = vector.load %arg3[%c0_3, %c0_4] : memref<16x128xf32, #tpu.memory_space<vmem>>, vector<16x128xf32>
    %c0_5 = arith.constant 0 : index
    %c0_6 = arith.constant 0 : index
    %3 = vector.load %arg4[%c0_5, %c0_6] : memref<16x128xf32, #tpu.memory_space<vmem>>, vector<16x128xf32>
    %cst = arith.constant 1.000000e+00 : f32
    %4 = vector.broadcast %cst : f32 to vector<16x128xf32>
    %5 = arith.subf %1, %4 : vector<16x128xf32>
    %cst_7 = arith.constant 0.000000e+00 : f32
    %6 = vector.broadcast %cst_7 : f32 to vector<16x128xf32>
    %7 = arith.maximumf %5, %6 : vector<16x128xf32>
    %cst_8 = arith.constant 1.000000e+00 : f32
    %8 = vector.broadcast %cst_8 : f32 to vector<16x128xf32>
    %9 = arith.subf %7, %8 : vector<16x128xf32>
    %cst_9 = arith.constant 5.000000e-05 : f32
    %10 = vector.broadcast %cst_9 : f32 to vector<16x128xf32>
    %11 = arith.mulf %9, %10 : vector<16x128xf32>
    %cst_10 = arith.constant -2.000000e+00 : f32
    %12 = vector.broadcast %cst_10 : f32 to vector<16x128xf32>
    %13 = arith.addf %12, %11 : vector<16x128xf32>
    %cst_11 = arith.constant 0.000000e+00 : f32
    %14 = vector.broadcast %cst_11 : f32 to vector<16x128xf32>
    %15 = arith.cmpf oeq, %7, %14 : vector<16x128xf32>
    %cst_12 = arith.constant 2.400020e+05 : f32
    %16 = vector.broadcast %cst_12 : f32 to vector<16x128xf32>
    %17 = arith.cmpf oeq, %7, %16 : vector<16x128xf32>
    %cst_13 = arith.constant 1.000000e+04 : f32
    %18 = vector.broadcast %cst_13 : f32 to vector<16x128xf32>
    %19 = arith.select %17, %18, %13 : vector<16x128xi1>, vector<16x128xf32>
    %cst_14 = arith.constant -1.000000e+04 : f32
    %20 = vector.broadcast %cst_14 : f32 to vector<16x128xf32>
    %21 = arith.select %15, %20, %19 : vector<16x128xi1>, vector<16x128xf32>
    %cst_15 = arith.constant 1.000000e+00 : f32
    %22 = vector.broadcast %cst_15 : f32 to vector<16x128xf32>
    %23 = arith.subf %1, %22 : vector<16x128xf32>
    %cst_16 = arith.constant 5.000000e-05 : f32
    %24 = vector.broadcast %cst_16 : f32 to vector<16x128xf32>
    %25 = arith.mulf %23, %24 : vector<16x128xf32>
    %cst_17 = arith.constant -2.000000e+00 : f32
    %26 = vector.broadcast %cst_17 : f32 to vector<16x128xf32>
    %27 = arith.addf %26, %25 : vector<16x128xf32>
    %cst_18 = arith.constant 0.000000e+00 : f32
    %28 = vector.broadcast %cst_18 : f32 to vector<16x128xf32>
    %29 = arith.cmpf oeq, %1, %28 : vector<16x128xf32>
    %cst_19 = arith.constant 2.400020e+05 : f32
    %30 = vector.broadcast %cst_19 : f32 to vector<16x128xf32>
    %31 = arith.cmpf oeq, %1, %30 : vector<16x128xf32>
    %cst_20 = arith.constant 1.000000e+04 : f32
    %32 = vector.broadcast %cst_20 : f32 to vector<16x128xf32>
    %33 = arith.select %31, %32, %27 : vector<16x128xi1>, vector<16x128xf32>
    %cst_21 = arith.constant -1.000000e+04 : f32
    %34 = vector.broadcast %cst_21 : f32 to vector<16x128xf32>
    %35 = arith.select %29, %34, %33 : vector<16x128xi1>, vector<16x128xf32>
    %36 = arith.subf %0, %21 : vector<16x128xf32>
    %cst_22 = arith.constant 0.000000e+00 : f32
    %37 = vector.broadcast %cst_22 : f32 to vector<16x128xf32>
    %38 = arith.maximumf %36, %37 : vector<16x128xf32>
    %39 = arith.subf %35, %0 : vector<16x128xf32>
    %cst_23 = arith.constant 0.000000e+00 : f32
    %40 = vector.broadcast %cst_23 : f32 to vector<16x128xf32>
    %41 = arith.maximumf %39, %40 : vector<16x128xf32>
    %cst_24 = arith.constant 0.000000e+00 : f32
    %42 = vector.broadcast %cst_24 : f32 to vector<16x128xf32>
    %43 = arith.cmpf oeq, %38, %42 : vector<16x128xf32>
    %cst_25 = arith.constant 0.000000e+00 : f32
    %44 = vector.broadcast %cst_25 : f32 to vector<16x128xf32>
    %45 = arith.cmpf oeq, %41, %44 : vector<16x128xf32>
    %46 = arith.andi %43, %45 : vector<16x128xi1>
    %cst_26 = arith.constant 1.000000e+00 : f32
    %47 = vector.broadcast %cst_26 : f32 to vector<16x128xf32>
    %48 = arith.select %46, %47, %38 : vector<16x128xi1>, vector<16x128xf32>
    %cst_27 = arith.constant 1.000000e+00 : f32
    %49 = vector.broadcast %cst_27 : f32 to vector<16x128xf32>
    %50 = arith.select %46, %49, %41 : vector<16x128xi1>, vector<16x128xf32>
    %51 = arith.mulf %2, %50 : vector<16x128xf32>
    %52 = arith.mulf %3, %48 : vector<16x128xf32>
    %53 = arith.addf %51, %52 : vector<16x128xf32>
    %54 = arith.addf %48, %50 : vector<16x128xf32>
    %55 = arith.divf %53, %54 : vector<16x128xf32>
    %c0_28 = arith.constant 0 : index
    %c0_29 = arith.constant 0 : index
    %56 = vector.load %arg5[%c0_28, %c0_29] : memref<16x128xf32, #tpu.memory_space<vmem>>, vector<16x128xf32>
    tpu.vector_store %arg5[%c0_28, %c0_29], %55 {strides = array<i32>} : memref<16x128xf32, #tpu.memory_space<vmem>>, vector<16x128xf32>,
    return
  }
  func.func @transform_0(%arg0: i32) -> (i32, i32) {
    %c0_i32 = arith.constant 0 : i32
    %c0_i32_0 = arith.constant 0 : i32
    return %arg0, %c0_i32 : i32, i32
  }
  func.func @transform_1(%arg0: i32) -> (i32, i32) {
    %c0_i32 = arith.constant 0 : i32
    %c0_i32_0 = arith.constant 0 : i32
    return %arg0, %c0_i32 : i32, i32
  }
  func.func @transform_2(%arg0: i32) -> (i32, i32) {
    %c0_i32 = arith.constant 0 : i32
    %c0_i32_0 = arith.constant 0 : i32
    return %arg0, %c0_i32 : i32, i32
  }
  func.func @transform_3(%arg0: i32) -> (i32, i32) {
    %c0_i32 = arith.constant 0 : i32
    %c0_i32_0 = arith.constant 0 : i32
    return %arg0, %c0_i32 : i32, i32
  }
  func.func @transform_4(%arg0: i32) -> (i32, i32) {
    %c0_i32 = arith.constant 0 : i32
    %c0_i32_0 = arith.constant 0 : i32
    return %arg0, %c0_i32 : i32, i32
  }
}

</mosaic_0001>

<llo_original>
// kernel: tpu_custom_call.1
$region0: #{tpu_custom_call.1}
  #allocation0 [shape = 'u32[]', space=smem, size = 0x4, offset = 0x4, fixed_abs, tag = 'smem constant byte address 0x4 - core index']
  #allocation1 [shape = 'u32[144,128]{1,0:T(1,128)}', space=vmem, size = 0x12000, scoped, tag = 'internal scratch']
  %s0 = inlined_call_operand.hbm [shape: f32[16,128], index: 0, kind: input, shape index: {}]
  %s1 = inlined_call_operand.hbm [shape: f32[16,128], index: 1, kind: input, shape index: {}]
  %s2 = inlined_call_operand.hbm [shape: f32[16,128], index: 2, kind: input, shape index: {}]
  %s3 = inlined_call_operand.hbm [shape: f32[16,128], index: 3, kind: input, shape index: {}]
  %s4 = inlined_call_operand.hbm [shape: f32[16,128], index: 4, kind: output, shape index: {}]
  %s5 = sld [smem:[#allocation0]]
  $region42: #{tpu_custom_call.1} parent=0
    _
  %s7 = ssub.s32 1, %s5
  %s8 = scalar_select 0, %s7, %s5
  $region1: #{tpu_custom_call.1} parent=0
    #allocation2 [shape = 'u8[8192]{0}', space=vmem, size = 0x2000, scoped, tag = 'input window, operand 0, single buffered']
    #allocation3 [shape = 's32[1]{0}', space=sflag, size = 0x4, scoped, tag = 'scoped memory for tpu_custom_call.1']
    #allocation4 [shape = 's32[1]{0}', space=sflag, size = 0x4, scoped, tag = 'scoped memory for tpu_custom_call.1']
    #allocation5 [shape = 'u8[8192]{0}', space=vmem, size = 0x2000, scoped, tag = 'input window, operand 1, single buffered']
    #allocation6 [shape = 's32[1]{0}', space=sflag, size = 0x4, scoped, tag = 'scoped memory for tpu_custom_call.1']
    #allocation7 [shape = 'u8[8192]{0}', space=vmem, size = 0x2000, scoped, tag = 'input window, operand 2, single buffered']
    #allocation8 [shape = 'u8[8192]{0}', space=vmem, size = 0x2000, scoped, tag = 'input window, operand 3, single buffered']
    #allocation9 [shape = 's32[1]{0}', space=sflag, size = 0x4, scoped, tag = 'scoped memory for tpu_custom_call.1']
    #allocation10 [shape = 'u8[8192]{0}', space=vmem, size = 0x2000, scoped, tag = 'output window, operand 0, single buffered']
    %9 = vsyncpa [#allocation3], 0
    %10 = vsyncpa [#allocation6], 0
    %11 = vsyncpa [#allocation9], 0
    %12 = vsyncpa [#allocation4], 0
    // Predicated region
    $region2: #{tpu_custom_call.1} parent=1 // pred_check
      _
    $region3: #{tpu_custom_call.1} parent=1 // pred_check_branch
      %14 = sbr.rel (0) target = $region5
    $region4: #{tpu_custom_call.1} parent=1 // pred_region
      %s16 = ssub.s32 256, 256
      %17 = vsyncadd [#allocation3], %s16
      %s18 = sshll.u32 [#allocation2], 4
      %s19 = int_to_ptr.vmem [resolvable:$true] %s18
      %24 = dma.hbm_to_vmem [thread:$0]  %s0, 256, %s19, [#allocation3], 128, 128, 8
    $region5: #{tpu_custom_call.1} parent=1 // pred_fallthru
      _
    // Predicated region
    $region6: #{tpu_custom_call.1} parent=1 // pred_check
      _
    $region7: #{tpu_custom_call.1} parent=1 // pred_check_branch
      %26 = sbr.rel (0) target = $region9
    $region8: #{tpu_custom_call.1} parent=1 // pred_region
      %s28 = ssub.s32 256, 256
      %29 = vsyncadd [#allocation6], %s28
      %s30 = sshll.u32 [#allocation5], 4
      %s31 = int_to_ptr.vmem [resolvable:$true] %s30
      %36 = dma.hbm_to_vmem [thread:$0]  %s1, 256, %s31, [#allocation6], 128, 128, 8
    $region9: #{tpu_custom_call.1} parent=1 // pred_fallthru
      _
    // Predicated region
    $region10: #{tpu_custom_call.1} parent=1 // pred_check
      _
    $region11: #{tpu_custom_call.1} parent=1 // pred_check_branch
      %38 = sbr.rel (0) target = $region13
    $region12: #{tpu_custom_call.1} parent=1 // pred_region
      %s40 = ssub.s32 256, 256
      %41 = vsyncadd [#allocation6], %s40
      %s42 = sshll.u32 [#allocation7], 4
      %s43 = int_to_ptr.vmem [resolvable:$true] %s42
      %48 = dma.hbm_to_vmem [thread:$0]  %s2, 256, %s43, [#allocation6], 128, 128, 8
    $region13: #{tpu_custom_call.1} parent=1 // pred_fallthru
      _
    // Predicated region
    $region14: #{tpu_custom_call.1} parent=1 // pred_check
      _
    $region15: #{tpu_custom_call.1} parent=1 // pred_check_branch
      %50 = sbr.rel (0) target = $region17
    $region16: #{tpu_custom_call.1} parent=1 // pred_region
      %s52 = ssub.s32 256, 256
      %53 = vsyncadd [#allocation9], %s52
      %s54 = sshll.u32 [#allocation8], 4
      %s55 = int_to_ptr.vmem [resolvable:$true] %s54
      %60 = dma.hbm_to_vmem [thread:$0]  %s3, 256, %s55, [#allocation9], 128, 128, 8
    $region17: #{tpu_custom_call.1} parent=1 // pred_fallthru
      _
    // Predicated region
    $region18: #{tpu_custom_call.1} parent=1 // pred_check
      _
    $region19: #{tpu_custom_call.1} parent=1 // pred_check_branch
      %62 = sbr.rel (0) target = $region21
    $region20: #{tpu_custom_call.1} parent=1 // pred_region
      %63 = dma.done [#allocation3], 256
    $region21: #{tpu_custom_call.1} parent=1 // pred_fallthru
      _
    // Predicated region
    $region22: #{tpu_custom_call.1} parent=1 // pred_check
      _
    $region23: #{tpu_custom_call.1} parent=1 // pred_check_branch
      %65 = sbr.rel (0) target = $region25
    $region24: #{tpu_custom_call.1} parent=1 // pred_region
      %66 = dma.done [#allocation6], 256
    $region25: #{tpu_custom_call.1} parent=1 // pred_fallthru
      _
    // Predicated region
    $region26: #{tpu_custom_call.1} parent=1 // pred_check
      _
    $region27: #{tpu_custom_call.1} parent=1 // pred_check_branch
      %68 = sbr.rel (0) target = $region29
    $region28: #{tpu_custom_call.1} parent=1 // pred_region
      %69 = dma.done [#allocation6], 256
    $region29: #{tpu_custom_call.1} parent=1 // pred_fallthru
      _
    // Predicated region
    $region30: #{tpu_custom_call.1} parent=1 // pred_check
      _
    $region31: #{tpu_custom_call.1} parent=1 // pred_check_branch
      %71 = sbr.rel (0) target = $region33
    $region32: #{tpu_custom_call.1} parent=1 // pred_region
      %72 = dma.done [#allocation9], 256
    $region33: #{tpu_custom_call.1} parent=1 // pred_fallthru
      _
    %v73 = vld [vmem:[#allocation2] sm:$0xff]
    %v74 = vld [vmem:[#allocation2 + $0x8] sm:$0xff]
    %v75 = vld [vmem:[#allocation5] sm:$0xff]
    %v76 = vld [vmem:[#allocation5 + $0x8] sm:$0xff]
    %v77 = vld [vmem:[#allocation7] sm:$0xff]
    %v78 = vld [vmem:[#allocation7 + $0x8] sm:$0xff]
    %v79 = vld [vmem:[#allocation8] sm:$0xff]
    %v80 = vld [vmem:[#allocation8 + $0x8] sm:$0xff]
    %v81 = vsub.f32 %v75, 1.0
    %v82 = vsub.f32 %v76, 1.0
    %v83 = vmax.f32 %v81, 0.0
    %v84 = vmax.f32 %v82, 0.0
    %v85 = vsub.f32 %v83, 1.0
    %v86 = vsub.f32 %v84, 1.0
    %v87 = vmul.f32 %v85, 5e-05
    %v88 = vmul.f32 %v86, 5e-05
    %v89 = vadd.f32 %v87, -2.0
    %v90 = vadd.f32 %v88, -2.0
    %vm91 = vcmp.eq.f32.partialorder %v83, 0.0
    %vm92 = vcmp.eq.f32.partialorder %v84, 0.0
    %vm93 = vcmp.eq.f32.partialorder %v83, 240002.0
    %vm94 = vcmp.eq.f32.partialorder %v84, 240002.0
    %v95 = vsel %vm93, 10000.0, %v89
    %v96 = vsel %vm94, 10000.0, %v90
    %v97 = vsel %vm91, -10000.0, %v95
    %v98 = vsel %vm92, -10000.0, %v96
    %v99 = vmul.f32 %v81, 5e-05
    %v100 = vmul.f32 %v82, 5e-05
    %v101 = vadd.f32 %v99, -2.0
    %v102 = vadd.f32 %v100, -2.0
    %vm103 = vcmp.eq.f32.partialorder %v75, 0.0
    %vm104 = vcmp.eq.f32.partialorder %v76, 0.0
    %vm105 = vcmp.eq.f32.partialorder %v75, 240002.0
    %vm106 = vcmp.eq.f32.partialorder %v76, 240002.0
    %v107 = vsel %vm105, 10000.0, %v101
    %v108 = vsel %vm106, 10000.0, %v102
    %v109 = vsel %vm103, -10000.0, %v107
    %v110 = vsel %vm104, -10000.0, %v108
    %v111 = vsub.f32 %v73, %v97
    %v112 = vsub.f32 %v74, %v98
    %v113 = vmax.f32 %v111, 0.0
    %v114 = vmax.f32 %v112, 0.0
    %v115 = vsub.f32 %v109, %v73
    %v116 = vsub.f32 %v110, %v74
    %v117 = vmax.f32 %v115, 0.0
    %v118 = vmax.f32 %v116, 0.0
    %vm119 = vcmp.eq.f32.partialorder %v113, 0.0
    %vm120 = vcmp.eq.f32.partialorder %v114, 0.0
    %vm121 = vcmp.eq.f32.partialorder %v117, 0.0
    %vm122 = vcmp.eq.f32.partialorder %v118, 0.0
    %vm123 = vmand %vm119, %vm121
    %vm124 = vmand %vm120, %vm122
    %v125 = vsel %vm123, 1.0, %v113
    %v126 = vsel %vm124, 1.0, %v114
    %v127 = vsel %vm123, 1.0, %v117
    %v128 = vsel %vm124, 1.0, %v118
    %v129 = vmul.f32 %v77, %v127
    %v130 = vmul.f32 %v78, %v128
    %v131 = vmul.f32 %v79, %v125
    %v132 = vmul.f32 %v80, %v126
    %v133 = vadd.f32 %v129, %v131
    %v134 = vadd.f32 %v130, %v132
    %v135 = vadd.f32 %v125, %v127
    %v136 = vadd.f32 %v126, %v128
    %v137 = vrcp.pop %v135
    %v138 = vmul.f32 %v133, %v137
    %v139 = vrcp.pop %v136
    %v140 = vmul.f32 %v134, %v139
    %141 = vst [vmem:[#allocation10] sm:$0xff] %v138
    %142 = vst [vmem:[#allocation10 + $0x8] sm:$0xff] %v140
    // Predicated region
    $region34: #{tpu_custom_call.1} parent=1 // pred_check
      _
    $region35: #{tpu_custom_call.1} parent=1 // pred_check_branch
      %144 = sbr.rel (0) target = $region37
    $region36: #{tpu_custom_call.1} parent=1 // pred_region
      %s146 = ssub.s32 256, 256
      %147 = vsyncadd [#allocation4], %s146
      %s148 = sshll.u32 [#allocation10], 4
      %s149 = int_to_ptr.vmem [resolvable:$true] %s148
      %154 = dma.vmem_to_hbm [thread:$0]  %s149, 256, %s4, [#allocation4], 128, 128, 8
    $region37: #{tpu_custom_call.1} parent=1 // pred_fallthru
      _
    // Predicated region
    $region38: #{tpu_custom_call.1} parent=1 // pred_check
      _
    $region39: #{tpu_custom_call.1} parent=1 // pred_check_branch
      %156 = sbr.rel (0) target = $region41
    $region40: #{tpu_custom_call.1} parent=1 // pred_region
      %157 = dma.done [#allocation4], 256
    $region41: #{tpu_custom_call.1} parent=1 // pred_fallthru
      _
    %158 = vsyncpa [#allocation3], 1
    %159 = vsyncpa [#allocation6], 1
    %160 = vsyncpa [#allocation9], 1
    %161 = vsyncpa [#allocation4], 1

</llo_original>
